<compile_context>
chip_gen: v6e
topology: v6e:2x2x1
jax: 0.10.0
libtpu: 0.0.40
codegen_flags: <defaults>
</compile_context>

<pallas_src>
import jax
import jax.numpy as jnp
from jax.experimental import pallas as pl
from jax.experimental.pallas import tpu as pltpu


def _conv_matmul_kernel(w_ref, p_ref, o_ref):
    # w_ref: (Cout, Kp)   p_ref: (1, Kp, HW)   o_ref: (1, Cout, HW)
    o_ref[0] = jnp.dot(w_ref[...], p_ref[0], preferred_element_type=jnp.float32)


def model_forward(x, weight):
    N, Cin, H, W = x.shape
    Cout, Cin_w, KH, KW = weight.shape
    assert Cin == Cin_w and KH == 3 and KW == 3
    HW = H * W
    assert HW % 128 == 0, "H*W must be a multiple of 128 for lane-dense tiles"

    x = x.astype(jnp.float32)
    weight = weight.astype(jnp.float32)

    # --- im2col glue (tiny XLA fusion):
    # patches[n, cin*9 + kh*3 + kw, h*W + w] = x_padded[n, cin, h+kh, w+kw]
    xp = jnp.pad(x, ((0, 0), (0, 0), (1, 1), (1, 1)))
    taps = [xp[:, :, dh:dh + H, dw:dw + W] for dh in range(KH) for dw in range(KW)]
    patches = jnp.stack(taps, axis=2).reshape(N, Cin * KH * KW, HW)      # (N, 27, HW)

    K = Cin * KH * KW
    Kp = ((K + 7) // 8) * 8                      # pad contraction dim to sublane multiple (27 -> 32)
    patches = jnp.pad(patches, ((0, 0), (0, Kp - K), (0, 0)))            # (N, Kp, HW)
    w2 = jnp.pad(weight.reshape(Cout, K), ((0, 0), (0, Kp - K)))         # (Cout, Kp)

    out_flat = pl.pallas_call(
        _conv_matmul_kernel,
        out_shape=jax.ShapeDtypeStruct((N, Cout, HW), jnp.float32),
        grid=(N,),
        in_specs=[pl.BlockSpec((Cout, Kp), lambda n: (0, 0)),
                  pl.BlockSpec((1, Kp, HW), lambda n: (n, 0, 0))],
        out_specs=pl.BlockSpec((1, Cout, HW), lambda n: (n, 0, 0)),
        compiler_params=pltpu.CompilerParams(dimension_semantics=("parallel",)),
    )(w2, patches)

    return out_flat.reshape(N, Cout, H, W)       # free row-major view -> NCHW


model_forward_jit = jax.jit(model_forward)


if __name__ == "__main__":
    key = jax.random.PRNGKey(0)
    kx, kw = jax.random.split(key)
    N, Cin, H, W, Cout = 2, 3, 32, 32, 32
    x = jax.random.normal(kx, (N, Cin, H, W), dtype=jnp.float32)
    weight = jax.random.normal(kw, (Cout, Cin, 3, 3), dtype=jnp.float32) * (1.0 / jnp.sqrt(27.0))

    out = jax.block_until_ready(model_forward_jit(x, weight))

    # Pure-JAX reference of the PyTorch forward (Conv2d, padding=1, no bias).
    ref = jax.lax.conv_general_dilated(
        x, weight, window_strides=(1, 1), padding=((1, 1), (1, 1)),
        dimension_numbers=("NCHW", "OIHW", "NCHW"),
        precision=jax.lax.Precision.HIGHEST)

    assert out.shape == (N, Cout, H, W), out.shape
    assert bool(jnp.allclose(out, ref, atol=1e-2, rtol=1e-2)), "mismatch vs reference conv"
    print("KERNEL_OK")
</pallas_src>

<mosaic_0001>
module attributes {stable_mosaic.version = 11 : i64} {
  func.func @_conv_matmul_kernel(%arg0: i32, %arg1: memref<32x32xf32, #tpu.memory_space<vmem>>, %arg2: memref<1x32x1024xf32, #tpu.memory_space<vmem>>, %arg3: memref<1x32x1024xf32, #tpu.memory_space<vmem>>) attributes {dimension_semantics = [#tpu.dimension_semantics<parallel>], iteration_bounds = array<i64: 2>, scalar_prefetch = 0 : i64, scratch_operands = 0 : i64, tpu.core_type = #tpu.core_type<tc>, window_params = [{pipeline_mode = #tpu.pipeline_mode<synchronous>, transform_indices = @transform_0, window_bounds = array<i64: 32, 32>}, {transform_indices = @transform_1, window_bounds = array<i64: 1, 32, 1024>}, {transform_indices = @transform_2, window_bounds = array<i64: 1, 32, 1024>}]} {
    %c0 = arith.constant 0 : index
    %c0_0 = arith.constant 0 : index
    %0 = vector.load %arg1[%c0, %c0_0] : memref<32x32xf32, #tpu.memory_space<vmem>>, vector<32x32xf32>
    %c0_1 = arith.constant 0 : index
    %c0_2 = arith.constant 0 : index
    %c0_3 = arith.constant 0 : index
    %1 = vector.load %arg2[%c0_1, %c0_2, %c0_3] : memref<1x32x1024xf32, #tpu.memory_space<vmem>>, vector<1x32x1024xf32>
    %2 = vector.shape_cast %1 : vector<1x32x1024xf32> to vector<32x1024xf32>
    %cst = arith.constant dense<0.000000e+00> : vector<32x1024xf32>
    %3 = tpu.matmul %0, %2, %cst {dimension_numbers = #tpu.dot_dimension_numbers<[1], [0], [0], [1], [0, 0, 1, 1], [], []>} : vector<32x32xf32>, vector<32x1024xf32>, vector<32x1024xf32> -> vector<32x1024xf32>
    %c0_4 = arith.constant 0 : index
    %c0_5 = arith.constant 0 : index
    %c0_6 = arith.constant 0 : index
    %4 = vector.load %arg3[%c0_4, %c0_5, %c0_6] : memref<1x32x1024xf32, #tpu.memory_space<vmem>>, vector<1x32x1024xf32>
    %5 = vector.shape_cast %4 : vector<1x32x1024xf32> to vector<32x1024xf32>
    %6 = vector.shape_cast %3 : vector<32x1024xf32> to vector<1x32x1024xf32>
    tpu.vector_store %arg3[%c0_4, %c0_5, %c0_6], %6 {strides = array<i32>} : memref<1x32x1024xf32, #tpu.memory_space<vmem>>, vector<1x32x1024xf32>,
    return
  }
  func.func @transform_0(%arg0: i32) -> (i32, i32) {
    %c0_i32 = arith.constant 0 : i32
    %c0_i32_0 = arith.constant 0 : i32
    %c0_i32_1 = arith.constant 0 : i32
    return %c0_i32, %c0_i32_0 : i32, i32
  }
  func.func @transform_1(%arg0: i32) -> (i32, i32, i32) {
    %c0_i32 = arith.constant 0 : i32
    %c0_i32_0 = arith.constant 0 : i32
    %c0_i32_1 = arith.constant 0 : i32
    return %arg0, %c0_i32, %c0_i32_0 : i32, i32, i32
  }
  func.func @transform_2(%arg0: i32) -> (i32, i32, i32) {
    %c0_i32 = arith.constant 0 : i32
    %c0_i32_0 = arith.constant 0 : i32
    %c0_i32_1 = arith.constant 0 : i32
    return %arg0, %c0_i32, %c0_i32_0 : i32, i32, i32
  }
}

</mosaic_0001>

<llo_original>
// kernel: model_forward.1
$region0: #{model_forward.1}
  #allocation0 [shape = 'u32[]', space=smem, size = 0x4, offset = 0x4, fixed_abs, tag = 'smem constant byte address 0x4 - core index']
  #allocation1 [shape = 'u32[144,128]{1,0:T(1,128)}', space=vmem, size = 0x12000, scoped, tag = 'internal scratch']
  %s0 = inlined_call_operand.vmem [shape: f32[32,32], index: 0, kind: input, shape index: {}]
  %s1 = inlined_call_operand.vmem [shape: f32[2,32,1024], index: 1, kind: input, shape index: {}]
  %s2 = inlined_call_operand.vmem [shape: f32[2,32,1024], index: 2, kind: output, shape index: {}]
  %s3 = sld [smem:[#allocation0]]
  $region41: #{model_forward.1} parent=0
    _
  %s5 = ssub.s32 1, %s3
  %s6 = scalar_select 0, %s5, %s3
  loop: start=0, step=1, limit=4
  $region2: #{model_forward.1} parent=0 // loop_pre_header
    _
  $region3: #{model_forward.1} parent=0 // loop_header
    %s8 = sphi 0, %s12
    %p9 = scmp.ge.s32.totalorder %s8, 4
    %s16 = sphi 0, %s16
    %s18 = sphi 0, %s16
    %s19 = sphi 0, %s18
    %s33 = sphi 0, %s19
    %s39 = sphi 0, %s41
    %s42 = sphi 0, %s39
    %s43 = sphi 0, %s42
    %s59 = sphi 0, %s43
    %s65 = sphi 0, %s67
    %s68 = sphi 0, %s65
    %s69 = sphi 0, %s68
    %s85 = sphi 0, %s69
  $region4: #{model_forward.1} parent=0 // loop_header_branch
    %11 = sbr.rel (%p9) target = $region8
  $region5: #{model_forward.1} parent=0 // loop_body
    %s13 = ssub.s32 %s8, 1
    %s14 = ssub.s32 %s8, 2
    %s15 = sadd.s32 %s8, 1
    %s17 = sadd.s32 %s16, 1
    %p20 = scmp.eq.s32.totalorder %s8, 1
    %p21 = scmp.ne.s32.totalorder %s16, %s18
    %p22 = scmp.eq.s32.totalorder %s8, 0
    %p23 = por %p21, %p22
    %p24 = scmp.ne.s32.totalorder %s16, %s18
    %p25 = scmp.eq.s32.totalorder %s13, 1
    %p26 = por %p24, %p25
    %p27 = scmp.ne.s32.totalorder %s18, %s19
    %p28 = scmp.eq.s32.totalorder %s13, 0
    %p29 = por %p27, %p28
    %p30 = scmp.ne.s32.totalorder %s18, %s19
    %p31 = scmp.eq.s32.totalorder %s14, 1
    %p32 = por %p30, %p31
    %p34 = scmp.ne.s32.totalorder %s19, %s33
    %p35 = scmp.eq.s32.totalorder %s14, 0
    %p36 = por %p34, %p35
    %s37 = ssub.s32 %s8, %s15
    %p38 = scmp.eq.s32.totalorder %s37, 0
    %s40 = sadd.s32 %s39, 1
    %s41 = scalar_select %p38, %s39, %s40
    %p44 = pneg %p38
    %p45 = scmp.eq.s32.totalorder %s8, 1
    %p46 = por %p44, %p45
    %p47 = scmp.ne.s32.totalorder %s39, %s42
    %p48 = scmp.eq.s32.totalorder %s8, 0
    %p49 = por %p47, %p48
    %p50 = scmp.ne.s32.totalorder %s39, %s42
    %p51 = scmp.eq.s32.totalorder %s13, 1
    %p52 = por %p50, %p51
    %p53 = scmp.ne.s32.totalorder %s42, %s43
    %p54 = scmp.eq.s32.totalorder %s13, 0
    %p55 = por %p53, %p54
    %p56 = scmp.ne.s32.totalorder %s42, %s43
    %p57 = scmp.eq.s32.totalorder %s14, 1
    %p58 = por %p56, %p57
    %p60 = scmp.ne.s32.totalorder %s43, %s59
    %p61 = scmp.eq.s32.totalorder %s14, 0
    %p62 = por %p60, %p61
    %s63 = ssub.s32 %s8, %s15
    %p64 = scmp.eq.s32.totalorder %s63, 0
    %s66 = sadd.s32 %s65, 1
    %s67 = scalar_select %p64, %s65, %s66
    %p70 = pneg %p64
    %p71 = scmp.eq.s32.totalorder %s8, 1
    %p72 = por %p70, %p71
    %p73 = scmp.ne.s32.totalorder %s65, %s68
    %p74 = scmp.eq.s32.totalorder %s8, 0
    %p75 = por %p73, %p74
    %p76 = scmp.ne.s32.totalorder %s65, %s68
    %p77 = scmp.eq.s32.totalorder %s13, 1
    %p78 = por %p76, %p77
    %p79 = scmp.ne.s32.totalorder %s68, %s69
    %p80 = scmp.eq.s32.totalorder %s13, 0
    %p81 = por %p79, %p80
    %p82 = scmp.ne.s32.totalorder %s68, %s69
    %p83 = scmp.eq.s32.totalorder %s14, 1
    %p84 = por %p82, %p83
    %p86 = scmp.ne.s32.totalorder %s69, %s85
    %p87 = scmp.eq.s32.totalorder %s14, 0
    %p88 = por %p86, %p87
    %p89 = scmp.le.s32.totalorder 1, %s8
    %p90 = scmp.lt.s32.totalorder %s8, 3
    %p91 = pnand %p89, %p90
    %p92 = pneg %p91
    // Predicated region
    $region9: #{model_forward.1} parent=5 // pred_check
      _
    $region10: #{model_forward.1} parent=5 // pred_check_branch
      %94 = sbr.rel (%p91) target = $region12
    $region11: #{model_forward.1} parent=5 // pred_region
      %s95 = ssub.s32 %s8, 1
      // Predicated region
      $region13: #{model_forward.1} parent=11 // pred_check
        %p96 = pneg %p29
      $region14: #{model_forward.1} parent=11 // pred_check_branch
        %98 = sbr.rel (%p96) target = $region16
      $region15: #{model_forward.1} parent=11 // pred_region
        _
      $region16: #{model_forward.1} parent=11 // pred_fallthru
        _
    $region12: #{model_forward.1} parent=5 // pred_fallthru
      _
    %p99 = scmp.lt.s32.totalorder %s8, 2
    // Predicated region
    $region17: #{model_forward.1} parent=5 // pred_check
      %p100 = pneg %p99
    $region18: #{model_forward.1} parent=5 // pred_check_branch
      %102 = sbr.rel (%p100) target = $region20
    $region19: #{model_forward.1} parent=5 // pred_region
      // Predicated region
      $region21: #{model_forward.1} parent=19 // pred_check
        %p103 = pneg %p49
      $region22: #{model_forward.1} parent=19 // pred_check_branch
        %105 = sbr.rel (%p103) target = $region24
      $region23: #{model_forward.1} parent=19 // pred_region
        %p106 = scmp.lt.s32.totalorder %s8, 1
        %s107 = scalar_select %p106, %s8, 1
        %s108 = smul.addr %s107, 32
        %s109 = smul.addr %s108, 8
        %s110 = scalar_lea.vmem %s1, %s109
      $region24: #{model_forward.1} parent=19 // pred_fallthru
        _
    $region20: #{model_forward.1} parent=5 // pred_fallthru
      _
    %p111 = scmp.le.s32.totalorder 1, %s8
    %p112 = scmp.lt.s32.totalorder %s8, 3
    %p113 = pnand %p111, %p112
    %p114 = pneg %p113
    // Predicated region
    $region25: #{model_forward.1} parent=5 // pred_check
      _
    $region26: #{model_forward.1} parent=5 // pred_check_branch
      %116 = sbr.rel (%p113) target = $region28
    $region27: #{model_forward.1} parent=5 // pred_region
      %s117 = ssub.s32 %s8, 1
      %p118 = pneg %p29
      %p119 = pneg %p26
      %p120 = scmp.lt.s32.totalorder %s13, 1
      %s121 = scalar_select %p120, %s13, 1
      %s122 = smul.addr %s121, 32
      %s123 = smul.addr %s122, 8
      %s124 = scalar_lea.vmem %s1, %s123
      %p125 = pneg %p55
      %p126 = pneg %p52
      %p127 = pneg %p81
      %p128 = pneg %p78
      %p129 = scmp.lt.s32.totalorder %s13, 1
      %s130 = scalar_select %p129, %s13, 1
      %s131 = smul.addr %s130, 32
      %s132 = smul.addr %s131, 8
      %s133 = scalar_lea.vmem %s2, %s132
      %p134 = scmp.lt.s32.totalorder %s13, 1
      %s135 = scalar_select %p134, %s13, 1
      %s136 = smul.addr %s135, 32
      %s137 = smul.addr %s136, 8
      %s138 = scalar_lea.vmem %s1, %s137
      %p139 = scmp.lt.s32.totalorder %s13, 1
      %s140 = scalar_select %p139, %s13, 1
      %s141 = smul.addr %s140, 32
      %s142 = smul.addr %s141, 8
      %s143 = scalar_lea.vmem %s2, %s142
      %v144 = vld [vmem:[%s0] sm:$0xff]
      %v145 = vld [vmem:[%s0 + $0x8] sm:$0xff]
      %v146 = vld [vmem:[%s0 + $0x10] sm:$0xff]
      %v147 = vld [vmem:[%s0 + $0x18] sm:$0xff]
      %v148 = vld [vmem:[%s138] sm:$0xff]
      %v149 = vld [vmem:[%s138 + $0x8] sm:$0xff]
      %v150 = vld [vmem:[%s138 + $0x10] sm:$0xff]
      %v151 = vld [vmem:[%s138 + $0x18] sm:$0xff]
      %v152 = vld [vmem:[%s138 + $0x20] sm:$0xff]
      %v153 = vld [vmem:[%s138 + $0x28] sm:$0xff]
      %v154 = vld [vmem:[%s138 + $0x30] sm:$0xff]
      %v155 = vld [vmem:[%s138 + $0x38] sm:$0xff]
      %v156 = vld [vmem:[%s138 + $0x40] sm:$0xff]
      %v157 = vld [vmem:[%s138 + $0x48] sm:$0xff]
      %v158 = vld [vmem:[%s138 + $0x50] sm:$0xff]
      %v159 = vld [vmem:[%s138 + $0x58] sm:$0xff]
      %v160 = vld [vmem:[%s138 + $0x60] sm:$0xff]
      %v161 = vld [vmem:[%s138 + $0x68] sm:$0xff]
      %v162 = vld [vmem:[%s138 + $0x70] sm:$0xff]
      %v163 = vld [vmem:[%s138 + $0x78] sm:$0xff]
      %v164 = vld [vmem:[%s138 + $0x80] sm:$0xff]
      %v165 = vld [vmem:[%s138 + $0x88] sm:$0xff]
      %v166 = vld [vmem:[%s138 + $0x90] sm:$0xff]
      %v167 = vld [vmem:[%s138 + $0x98] sm:$0xff]
      %v168 = vld [vmem:[%s138 + $0xa0] sm:$0xff]
      %v169 = vld [vmem:[%s138 + $0xa8] sm:$0xff]
      %v170 = vld [vmem:[%s138 + $0xb0] sm:$0xff]
      %v171 = vld [vmem:[%s138 + $0xb8] sm:$0xff]
      %v172 = vld [vmem:[%s138 + $0xc0] sm:$0xff]
      %v173 = vld [vmem:[%s138 + $0xc8] sm:$0xff]
      %v174 = vld [vmem:[%s138 + $0xd0] sm:$0xff]
      %v175 = vld [vmem:[%s138 + $0xd8] sm:$0xff]
      %v176 = vld [vmem:[%s138 + $0xe0] sm:$0xff]
      %v177 = vld [vmem:[%s138 + $0xe8] sm:$0xff]
      %v178 = vld [vmem:[%s138 + $0xf0] sm:$0xff]
      %v179 = vld [vmem:[%s138 + $0xf8] sm:$0xff]
      %vm180 = vcmask 261120
      %v182 = vsel %vm180, %v144, 0
      %v185 = vsel %vm180, %v145, 0
      %v188 = vsel %vm180, %v146, 0
      %v191 = vsel %vm180, %v147, 0
      %193 = vmatprep.subr.mxu0 0.0
      %194 = vmatpush1.msra.mxu0 0.0
      %195 = vmatprep.subr.mxu0 0.0
      %196 = vmatpush1.msra.mxu0 0.0
      %197 = vmatprep.subr.mxu0 0.0
      %198 = vmatpush1.msra.mxu0 0.0
      %199 = vmatprep.subr.mxu0 0.0
      %200 = vmatpush1.msra.mxu0 0.0
      %201 = vmatprep.subr.mxu0 0.0
      %202 = vmatpush1.msra.mxu0 0.0
      %203 = vmatprep.subr.mxu0 0.0
      %204 = vmatpush1.msra.mxu0 0.0
      %205 = vmatprep.subr.mxu0 0.0
      %206 = vmatpush1.msra.mxu0 0.0
      %207 = vmatprep.subr.mxu0 0.0
      %208 = vmatpush1.msra.mxu0 0.0
      %209 = vmatprep.subr.mxu0 0.0
      %210 = vmatpush1.msra.mxu0 0.0
      %211 = vmatprep.subr.mxu0 0.0
      %212 = vmatpush1.msra.mxu0 0.0
      %213 = vmatprep.subr.mxu0 0.0
      %214 = vmatpush1.msra.mxu0 0.0
      %215 = vmatprep.subr.mxu0 0.0
      %216 = vmatpush1.msra.mxu0 0.0
      %217 = vmatprep.subr.mxu0 %v173
      %218 = vmatpush1.msra.mxu0 %v172
      %219 = vmatprep.subr.mxu0 %v165
      %220 = vmatpush1.msra.mxu0 %v164
      %221 = vmatprep.subr.mxu0 %v157
      %222 = vmatpush1.msra.mxu0 %v156
      %223 = vmatprep.subr.mxu0 %v149
      %224 = vmatpush1.msra.mxu0 %v148
      %225 = vmatprep.subr.mxu0 0.0
      %226 = vmatpush2.msra.mxu0 0.0
      %227 = vmatprep.subr.mxu0 0.0
      %228 = vmatpush2.msra.mxu0 0.0
      %229 = vmatprep.subr.mxu0 0.0
      %230 = vmatpush2.msra.mxu0 0.0
      %231 = vmatprep.subr.mxu0 0.0
      %232 = vmatpush2.msra.mxu0 0.0
      %233 = vmatprep.subr.mxu0 0.0
      %234 = vmatpush2.msra.mxu0 0.0
      %235 = vmatprep.subr.mxu0 0.0
      %236 = vmatpush2.msra.mxu0 0.0
      %237 = vmatprep.subr.mxu0 0.0
      %238 = vmatpush2.msra.mxu0 0.0
      %239 = vmatprep.subr.mxu0 0.0
      %240 = vmatpush2.msra.mxu0 0.0
      %241 = vmatprep.subr.mxu0 0.0
      %242 = vmatpush2.msra.mxu0 0.0
      %243 = vmatprep.subr.mxu0 0.0
      %244 = vmatpush2.msra.mxu0 0.0
      %245 = vmatprep.subr.mxu0 0.0
      %246 = vmatpush2.msra.mxu0 0.0
      %247 = vmatprep.subr.mxu0 0.0
      %248 = vmatpush2.msra.mxu0 0.0
      %249 = vmatprep.subr.mxu0 0.0
      %250 = vmatpush2.msra.mxu0 0.0
      %251 = vmatprep.subr.mxu0 0.0
      %252 = vmatpush2.msra.mxu0 0.0
      %253 = vmatprep.subr.mxu0 0.0
      %254 = vmatpush2.msra.mxu0 0.0
      %255 = vmatprep.subr.mxu0 0.0
      %256 = vmatpush2.msra.mxu0 0.0
      %257 = vmatprep.mubr.f32.mxu0 0.0
      %258 = vmatmul.mubr.f32.gmra.mxu0 %v182
      %v259 = vpop.f32.mrf.mxu0
      %v260 = vadd.f32 0.0, %v259
      %v261 = vpop.f32.mrf.mxu0
      %v262 = vadd.f32 0.0, %v261
      %263 = vmatprep.mubr.f32.mxu0 0.0
      %264 = vmatmul.mubr.f32.gmra.mxu0 %v185
      %v265 = vpop.f32.mrf.mxu0
      %v266 = vadd.f32 0.0, %v265
      %v267 = vpop.f32.mrf.mxu0
      %v268 = vadd.f32 0.0, %v267
      %269 = vmatprep.mubr.f32.mxu0 0.0
      %270 = vmatmul.mubr.f32.gmra.mxu0 %v188
      %v271 = vpop.f32.mrf.mxu0
      %v272 = vadd.f32 0.0, %v271
      %v273 = vpop.f32.mrf.mxu0
      %v274 = vadd.f32 0.0, %v273
      %275 = vmatprep.mubr.f32.mxu0 0.0
      %276 = vmatmul.mubr.f32.gmra.mxu0 %v191
      %v277 = vpop.f32.mrf.mxu0
      %v278 = vadd.f32 0.0, %v277
      %v279 = vpop.f32.mrf.mxu0
      %v280 = vadd.f32 0.0, %v279
      %281 = vdwg.mxu0
      %282 = vmatprep.subr.mxu0 0.0
      %283 = vmatpush1.msra.mxu0 0.0
      %284 = vmatprep.subr.mxu0 0.0
      %285 = vmatpush1.msra.mxu0 0.0
      %286 = vmatprep.subr.mxu0 0.0
      %287 = vmatpush1.msra.mxu0 0.0
      %288 = vmatprep.subr.mxu0 0.0
      %289 = vmatpush1.msra.mxu0 0.0
      %290 = vmatprep.subr.mxu0 0.0
      %291 = vmatpush1.msra.mxu0 0.0
      %292 = vmatprep.subr.mxu0 0.0
      %293 = vmatpush1.msra.mxu0 0.0
      %294 = vmatprep.subr.mxu0 0.0
      %295 = vmatpush1.msra.mxu0 0.0
      %296 = vmatprep.subr.mxu0 0.0
      %297 = vmatpush1.msra.mxu0 0.0
      %298 = vmatprep.subr.mxu0 0.0
      %299 = vmatpush1.msra.mxu0 0.0
      %300 = vmatprep.subr.mxu0 0.0
      %301 = vmatpush1.msra.mxu0 0.0
      %302 = vmatprep.subr.mxu0 0.0
      %303 = vmatpush1.msra.mxu0 0.0
      %304 = vmatprep.subr.mxu0 0.0
      %305 = vmatpush1.msra.mxu0 0.0
      %306 = vmatprep.subr.mxu0 %v175
      %307 = vmatpush1.msra.mxu0 %v174
      %308 = vmatprep.subr.mxu0 %v167
      %309 = vmatpush1.msra.mxu0 %v166
      %310 = vmatprep.subr.mxu0 %v159
      %311 = vmatpush1.msra.mxu0 %v158
      %312 = vmatprep.subr.mxu0 %v151
      %313 = vmatpush1.msra.mxu0 %v150
      %314 = vmatprep.subr.mxu0 0.0
      %315 = vmatpush2.msra.mxu0 0.0
      %316 = vmatprep.subr.mxu0 0.0
      %317 = vmatpush2.msra.mxu0 0.0
      %318 = vmatprep.subr.mxu0 0.0
      %319 = vmatpush2.msra.mxu0 0.0
      %320 = vmatprep.subr.mxu0 0.0
      %321 = vmatpush2.msra.mxu0 0.0
      %322 = vmatprep.subr.mxu0 0.0
      %323 = vmatpush2.msra.mxu0 0.0
      %324 = vmatprep.subr.mxu0 0.0
      %325 = vmatpush2.msra.mxu0 0.0
      %326 = vmatprep.subr.mxu0 0.0
      %327 = vmatpush2.msra.mxu0 0.0
      %328 = vmatprep.subr.mxu0 0.0
      %329 = vmatpush2.msra.mxu0 0.0
      %330 = vmatprep.subr.mxu0 0.0
      %331 = vmatpush2.msra.mxu0 0.0
      %332 = vmatprep.subr.mxu0 0.0
      %333 = vmatpush2.msra.mxu0 0.0
      %334 = vmatprep.subr.mxu0 0.0
      %335 = vmatpush2.msra.mxu0 0.0
      %336 = vmatprep.subr.mxu0 0.0
      %337 = vmatpush2.msra.mxu0 0.0
      %338 = vmatprep.subr.mxu0 0.0
      %339 = vmatpush2.msra.mxu0 0.0
      %340 = vmatprep.subr.mxu0 0.0
      %341 = vmatpush2.msra.mxu0 0.0
      %342 = vmatprep.subr.mxu0 0.0
      %343 = vmatpush2.msra.mxu0 0.0
      %344 = vmatprep.subr.mxu0 0.0
      %345 = vmatpush2.msra.mxu0 0.0
      %346 = vmatprep.mubr.f32.mxu0 0.0
      %347 = vmatmul.mubr.f32.gmra.mxu0 %v182
      %v348 = vpop.f32.mrf.mxu0
      %v349 = vadd.f32 0.0, %v348
      %v350 = vpop.f32.mrf.mxu0
      %v351 = vadd.f32 0.0, %v350
      %352 = vmatprep.mubr.f32.mxu0 0.0
      %353 = vmatmul.mubr.f32.gmra.mxu0 %v185
      %v354 = vpop.f32.mrf.mxu0
      %v355 = vadd.f32 0.0, %v354
      %v356 = vpop.f32.mrf.mxu0
      %v357 = vadd.f32 0.0, %v356
      %358 = vmatprep.mubr.f32.mxu0 0.0
      %359 = vmatmul.mubr.f32.gmra.mxu0 %v188
      %v360 = vpop.f32.mrf.mxu0
      %v361 = vadd.f32 0.0, %v360
      %v362 = vpop.f32.mrf.mxu0
      %v363 = vadd.f32 0.0, %v362
      %364 = vmatprep.mubr.f32.mxu0 0.0
      %365 = vmatmul.mubr.f32.gmra.mxu0 %v191
      %v366 = vpop.f32.mrf.mxu0
      %v367 = vadd.f32 0.0, %v366
      %v368 = vpop.f32.mrf.mxu0
      %v369 = vadd.f32 0.0, %v368
      %370 = vdwg.mxu0
      %371 = vmatprep.subr.mxu0 0.0
      %372 = vmatpush1.msra.mxu0 0.0
      %373 = vmatprep.subr.mxu0 0.0
      %374 = vmatpush1.msra.mxu0 0.0
      %375 = vmatprep.subr.mxu0 0.0
      %376 = vmatpush1.msra.mxu0 0.0
      %377 = vmatprep.subr.mxu0 0.0
      %378 = vmatpush1.msra.mxu0 0.0
      %379 = vmatprep.subr.mxu0 0.0
      %380 = vmatpush1.msra.mxu0 0.0
      %381 = vmatprep.subr.mxu0 0.0
      %382 = vmatpush1.msra.mxu0 0.0
      %383 = vmatprep.subr.mxu0 0.0
      %384 = vmatpush1.msra.mxu0 0.0
      %385 = vmatprep.subr.mxu0 0.0
      %386 = vmatpush1.msra.mxu0 0.0
      %387 = vmatprep.subr.mxu0 0.0
      %388 = vmatpush1.msra.mxu0 0.0
      %389 = vmatprep.subr.mxu0 0.0
      %390 = vmatpush1.msra.mxu0 0.0
      %391 = vmatprep.subr.mxu0 0.0
      %392 = vmatpush1.msra.mxu0 0.0
      %393 = vmatprep.subr.mxu0 0.0
      %394 = vmatpush1.msra.mxu0 0.0
      %395 = vmatprep.subr.mxu0 %v177
      %396 = vmatpush1.msra.mxu0 %v176
      %397 = vmatprep.subr.mxu0 %v169
      %398 = vmatpush1.msra.mxu0 %v168
      %399 = vmatprep.subr.mxu0 %v161
      %400 = vmatpush1.msra.mxu0 %v160
      %401 = vmatprep.subr.mxu0 %v153
      %402 = vmatpush1.msra.mxu0 %v152
      %403 = vmatprep.subr.mxu0 0.0
      %404 = vmatpush2.msra.mxu0 0.0
      %405 = vmatprep.subr.mxu0 0.0
      %406 = vmatpush2.msra.mxu0 0.0
      %407 = vmatprep.subr.mxu0 0.0
      %408 = vmatpush2.msra.mxu0 0.0
      %409 = vmatprep.subr.mxu0 0.0
      %410 = vmatpush2.msra.mxu0 0.0
      %411 = vmatprep.subr.mxu0 0.0
      %412 = vmatpush2.msra.mxu0 0.0
      %413 = vmatprep.subr.mxu0 0.0
      %414 = vmatpush2.msra.mxu0 0.0
      %415 = vmatprep.subr.mxu0 0.0
      %416 = vmatpush2.msra.mxu0 0.0
      %417 = vmatprep.subr.mxu0 0.0
      %418 = vmatpush2.msra.mxu0 0.0
      %419 = vmatprep.subr.mxu0 0.0
      %420 = vmatpush2.msra.mxu0 0.0
      %421 = vmatprep.subr.mxu0 0.0
      %422 = vmatpush2.msra.mxu0 0.0
      %423 = vmatprep.subr.mxu0 0.0
      %424 = vmatpush2.msra.mxu0 0.0
      %425 = vmatprep.subr.mxu0 0.0
      %426 = vmatpush2.msra.mxu0 0.0
      %427 = vmatprep.subr.mxu0 0.0
      %428 = vmatpush2.msra.mxu0 0.0
      %429 = vmatprep.subr.mxu0 0.0
      %430 = vmatpush2.msra.mxu0 0.0
      %431 = vmatprep.subr.mxu0 0.0
      %432 = vmatpush2.msra.mxu0 0.0
      %433 = vmatprep.subr.mxu0 0.0
      %434 = vmatpush2.msra.mxu0 0.0
      %435 = vmatprep.mubr.f32.mxu0 0.0
      %436 = vmatmul.mubr.f32.gmra.mxu0 %v182
      %v437 = vpop.f32.mrf.mxu0
      %v438 = vadd.f32 0.0, %v437
      %v439 = vpop.f32.mrf.mxu0
      %v440 = vadd.f32 0.0, %v439
      %441 = vmatprep.mubr.f32.mxu0 0.0
      %442 = vmatmul.mubr.f32.gmra.mxu0 %v185
      %v443 = vpop.f32.mrf.mxu0
      %v444 = vadd.f32 0.0, %v443
      %v445 = vpop.f32.mrf.mxu0
      %v446 = vadd.f32 0.0, %v445
      %447 = vmatprep.mubr.f32.mxu0 0.0
      %448 = vmatmul.mubr.f32.gmra.mxu0 %v188
      %v449 = vpop.f32.mrf.mxu0
      %v450 = vadd.f32 0.0, %v449
      %v451 = vpop.f32.mrf.mxu0
      %v452 = vadd.f32 0.0, %v451
      %453 = vmatprep.mubr.f32.mxu0 0.0
      %454 = vmatmul.mubr.f32.gmra.mxu0 %v191
      %v455 = vpop.f32.mrf.mxu0
      %v456 = vadd.f32 0.0, %v455
      %v457 = vpop.f32.mrf.mxu0
      %v458 = vadd.f32 0.0, %v457
      %459 = vdwg.mxu0
      %460 = vmatprep.subr.mxu0 0.0
      %461 = vmatpush1.msra.mxu0 0.0
      %462 = vmatprep.subr.mxu0 0.0
      %463 = vmatpush1.msra.mxu0 0.0
      %464 = vmatprep.subr.mxu0 0.0
      %465 = vmatpush1.msra.mxu0 0.0
      %466 = vmatprep.subr.mxu0 0.0
      %467 = vmatpush1.msra.mxu0 0.0
      %468 = vmatprep.subr.mxu0 0.0
      %469 = vmatpush1.msra.mxu0 0.0
      %470 = vmatprep.subr.mxu0 0.0
      %471 = vmatpush1.msra.mxu0 0.0
      %472 = vmatprep.subr.mxu0 0.0
      %473 = vmatpush1.msra.mxu0 0.0
      %474 = vmatprep.subr.mxu0 0.0
      %475 = vmatpush1.msra.mxu0 0.0
      %476 = vmatprep.subr.mxu0 0.0
      %477 = vmatpush1.msra.mxu0 0.0
      %478 = vmatprep.subr.mxu0 0.0
      %479 = vmatpush1.msra.mxu0 0.0
      %480 = vmatprep.subr.mxu0 0.0
      %481 = vmatpush1.msra.mxu0 0.0
      %482 = vmatprep.subr.mxu0 0.0
      %483 = vmatpush1.msra.mxu0 0.0
      %484 = vmatprep.subr.mxu0 %v179
      %485 = vmatpush1.msra.mxu0 %v178
      %486 = vmatprep.subr.mxu0 %v171
      %487 = vmatpush1.msra.mxu0 %v170
      %488 = vmatprep.subr.mxu0 %v163
      %489 = vmatpush1.msra.mxu0 %v162
      %490 = vmatprep.subr.mxu0 %v155
      %491 = vmatpush1.msra.mxu0 %v154
      %492 = vmatprep.subr.mxu0 0.0
      %493 = vmatpush2.msra.mxu0 0.0
      %494 = vmatprep.subr.mxu0 0.0
      %495 = vmatpush2.msra.mxu0 0.0
      %496 = vmatprep.subr.mxu0 0.0
      %497 = vmatpush2.msra.mxu0 0.0
      %498 = vmatprep.subr.mxu0 0.0
      %499 = vmatpush2.msra.mxu0 0.0
      %500 = vmatprep.subr.mxu0 0.0
      %501 = vmatpush2.msra.mxu0 0.0
      %502 = vmatprep.subr.mxu0 0.0
      %503 = vmatpush2.msra.mxu0 0.0
      %504 = vmatprep.subr.mxu0 0.0
      %505 = vmatpush2.msra.mxu0 0.0
      %506 = vmatprep.subr.mxu0 0.0
      %507 = vmatpush2.msra.mxu0 0.0
      %508 = vmatprep.subr.mxu0 0.0
      %509 = vmatpush2.msra.mxu0 0.0
      %510 = vmatprep.subr.mxu0 0.0
      %511 = vmatpush2.msra.mxu0 0.0
      %512 = vmatprep.subr.mxu0 0.0
      %513 = vmatpush2.msra.mxu0 0.0
      %514 = vmatprep.subr.mxu0 0.0
      %515 = vmatpush2.msra.mxu0 0.0
      %516 = vmatprep.subr.mxu0 0.0
      %517 = vmatpush2.msra.mxu0 0.0
      %518 = vmatprep.subr.mxu0 0.0
      %519 = vmatpush2.msra.mxu0 0.0
      %520 = vmatprep.subr.mxu0 0.0
      %521 = vmatpush2.msra.mxu0 0.0
      %522 = vmatprep.subr.mxu0 0.0
      %523 = vmatpush2.msra.mxu0 0.0
      %524 = vmatprep.mubr.f32.mxu0 0.0
      %525 = vmatmul.mubr.f32.gmra.mxu0 %v182
      %v526 = vpop.f32.mrf.mxu0
      %v527 = vadd.f32 0.0, %v526
      %v528 = vpop.f32.mrf.mxu0
      %v529 = vadd.f32 0.0, %v528
      %530 = vmatprep.mubr.f32.mxu0 0.0
      %531 = vmatmul.mubr.f32.gmra.mxu0 %v185
      %v532 = vpop.f32.mrf.mxu0
      %v533 = vadd.f32 0.0, %v532
      %v534 = vpop.f32.mrf.mxu0
      %v535 = vadd.f32 0.0, %v534
      %536 = vmatprep.mubr.f32.mxu0 0.0
      %537 = vmatmul.mubr.f32.gmra.mxu0 %v188
      %v538 = vpop.f32.mrf.mxu0
      %v539 = vadd.f32 0.0, %v538
      %v540 = vpop.f32.mrf.mxu0
      %v541 = vadd.f32 0.0, %v540
      %542 = vmatprep.mubr.f32.mxu0 0.0
      %543 = vmatmul.mubr.f32.gmra.mxu0 %v191
      %v544 = vpop.f32.mrf.mxu0
      %v545 = vadd.f32 0.0, %v544
      %v546 = vpop.f32.mrf.mxu0
      %v547 = vadd.f32 0.0, %v546
      %548 = vdwg.mxu0
      %549 = vst [vmem:[%s143] sm:$0xff] %v260
      %550 = vst [vmem:[%s143 + $0x8] sm:$0xff] %v262
      %551 = vst [vmem:[%s143 + $0x10] sm:$0xff] %v349
      %552 = vst [vmem:[%s143 + $0x18] sm:$0xff] %v351
      %553 = vst [vmem:[%s143 + $0x20] sm:$0xff] %v438
      %554 = vst [vmem:[%s143 + $0x28] sm:$0xff] %v440
      %555 = vst [vmem:[%s143 + $0x30] sm:$0xff] %v527
      %556 = vst [vmem:[%s143 + $0x38] sm:$0xff] %v529
      %557 = vst [vmem:[%s143 + $0x40] sm:$0xff] %v266
      %558 = vst [vmem:[%s143 + $0x48] sm:$0xff] %v268
      %559 = vst [vmem:[%s143 + $0x50] sm:$0xff] %v355
      %560 = vst [vmem:[%s143 + $0x58] sm:$0xff] %v357
      %561 = vst [vmem:[%s143 + $0x60] sm:$0xff] %v444
      %562 = vst [vmem:[%s143 + $0x68] sm:$0xff] %v446
      %563 = vst [vmem:[%s143 + $0x70] sm:$0xff] %v533
      %564 = vst [vmem:[%s143 + $0x78] sm:$0xff] %v535
      %565 = vst [vmem:[%s143 + $0x80] sm:$0xff] %v272
      %566 = vst [vmem:[%s143 + $0x88] sm:$0xff] %v274
      %567 = vst [vmem:[%s143 + $0x90] sm:$0xff] %v361
      %568 = vst [vmem:[%s143 + $0x98] sm:$0xff] %v363
      %569 = vst [vmem:[%s143 + $0xa0] sm:$0xff] %v450
      %570 = vst [vmem:[%s143 + $0xa8] sm:$0xff] %v452
      %571 = vst [vmem:[%s143 + $0xb0] sm:$0xff] %v539
      %572 = vst [vmem:[%s143 + $0xb8] sm:$0xff] %v541
      %573 = vst [vmem:[%s143 + $0xc0] sm:$0xff] %v278
      %574 = vst [vmem:[%s143 + $0xc8] sm:$0xff] %v280
      %575 = vst [vmem:[%s143 + $0xd0] sm:$0xff] %v367
      %576 = vst [vmem:[%s143 + $0xd8] sm:$0xff] %v369
      %577 = vst [vmem:[%s143 + $0xe0] sm:$0xff] %v456
      %578 = vst [vmem:[%s143 + $0xe8] sm:$0xff] %v458
      %579 = vst [vmem:[%s143 + $0xf0] sm:$0xff] %v545
      %580 = vst [vmem:[%s143 + $0xf8] sm:$0xff] %v547
      %p581 = scmp.lt.s32.totalorder %s13, 1
      %s582 = scalar_select %p581, %s13, 1
      %s583 = smul.addr %s582, 32
      %s584 = smul.addr %s583, 8
      %s585 = scalar_lea.vmem %s2, %s584
      // Predicated region
      $region29: #{model_forward.1} parent=27 // pred_check
        %p586 = pneg %p78
      $region30: #{model_forward.1} parent=27 // pred_check_branch
        %588 = sbr.rel (%p586) target = $region32
      $region31: #{model_forward.1} parent=27 // pred_region
        _
      $region32: #{model_forward.1} parent=27 // pred_fallthru
        _
    $region28: #{model_forward.1} parent=5 // pred_fallthru
      _
    %p589 = scmp.le.s32.totalorder 2, %s8
    // Predicated region
    $region33: #{model_forward.1} parent=5 // pred_check
      %p590 = pneg %p589
    $region34: #{model_forward.1} parent=5 // pred_check_branch
      %592 = sbr.rel (%p590) target = $region36
    $region35: #{model_forward.1} parent=5 // pred_region
      %s593 = ssub.s32 %s8, 2
      // Predicated region
      $region37: #{model_forward.1} parent=35 // pred_check
        %p594 = pneg %p84
      $region38: #{model_forward.1} parent=35 // pred_check_branch
        %596 = sbr.rel (%p594) target = $region40
      $region39: #{model_forward.1} parent=35 // pred_region
        %p597 = scmp.lt.s32.totalorder %s14, 1
        %s598 = scalar_select %p597, %s14, 1
        %s599 = smul.addr %s598, 32
        %s600 = smul.addr %s599, 8
        %s601 = scalar_lea.vmem %s2, %s600
      $region40: #{model_forward.1} parent=35 // pred_fallthru
        _
    $region36: #{model_forward.1} parent=5 // pred_fallthru
      _
  $region6: #{model_forward.1} parent=0 // loop_footer
    %s12 = sadd.s32 1, %s8
  $region7: #{model_forward.1} parent=0 // loop_footer_branch
    %7 = sbr.rel target = $region3
  $region8: #{model_forward.1} parent=0 // loop_exit
    _

</llo_original>
